<compile_context>
chip_gen: v7x
topology: tpu7x:2x2x1
jax: 0.10.0
libtpu: 0.0.40
codegen_flags: <defaults>
</compile_context>

<pallas_src>
import functools
import math

import jax
import jax.numpy as jnp
from jax.experimental import pallas as pl
from jax.experimental.pallas import tpu as pltpu

KERNEL_SIZE = 11
SIGMA = 1.5
DATA_RANGE = 1.0
K1 = 0.01
K2 = 0.03

# bf16 operands for the MXU matmul (f32 accumulation).  jnp.float32 restores
# near-exact parity with torchmetrics' f32 conv at ~3x MXU cost.
MATMUL_DTYPE = jnp.bfloat16


def _ssim_kernel(x_ref, y_ref, gh_ref, sel_ref, out_ref, *,
                 n_img, w_in, gauss, c1, c2):
    """One grid step = a lane-dense batch of `n_img` (n, c) images.

    x_ref / y_ref : (H, n_img*W)   images side-by-side along the lane axis
    gh_ref        : (h_out, H)     dense band row filter (pad+crop folded)
    sel_ref       : (n_img, n_img*W) 0/1 per-image valid-column selector
    out_ref       : (1, 1, n_img)  per-image sums of the cropped SSIM map
    """
    x = x_ref[...]
    y = y_ref[...]

    # Five filter inputs side-by-side along lanes -> the row (sublane)
    # direction of all five gaussian filters is ONE dense MXU matmul with
    # no structural zeros and good N utilization.
    xs = jnp.concatenate([x, y, x * x, y * y, x * y], axis=1)  # (H, 5*n_img*W)

    t = jnp.dot(gh_ref[...], xs,
                preferred_element_type=jnp.float32)            # (h_out, 5*n_img*W) f32

    # Column (lane) gaussian filter as K shift-and-FMA passes (XLU + VPU; the
    # MXU stays free).  The pad+crop fold guarantees every *kept* output
    # column c < w_out only reads lanes of its own image, so rolling the whole
    # 5-channel stack never mixes images/channels for columns we keep.
    lanes = t.shape[1]
    f = t * gauss[0]
    for j in range(1, len(gauss)):
        f = f + gauss[j] * pltpu.roll(t, shift=lanes - j, axis=1)

    w_lanes = n_img * w_in
    mu_x = f[:, 0 * w_lanes:1 * w_lanes]
    mu_y = f[:, 1 * w_lanes:2 * w_lanes]
    e_xx = f[:, 2 * w_lanes:3 * w_lanes]
    e_yy = f[:, 3 * w_lanes:4 * w_lanes]
    e_xy = f[:, 4 * w_lanes:5 * w_lanes]

    mu_x2 = mu_x * mu_x
    mu_y2 = mu_y * mu_y
    mu_xy = mu_x * mu_y

    sigma_x = e_xx - mu_x2
    sigma_y = e_yy - mu_y2
    sigma_xy = e_xy - mu_xy

    num = (2.0 * mu_xy + c1) * (2.0 * sigma_xy + c2)
    den = (mu_x2 + mu_y2 + c1) * (sigma_x + sigma_y + c2)
    # Valid columns always have den >= ~c1*c2 (~9e-8); the discarded columns
    # (c >= w_out, zeroed by `sel`) may hold rolled-in garbage, so clamp to
    # keep them finite.  Never changes a kept value.
    den = jnp.maximum(den, jnp.float32(1e-20))
    ssim_map = num / den                                       # (h_out, n_img*W)

    # Exact f32 per-image reduction: sublane reduce first, then a masked lane
    # reduce against the hoisted constant selector (no per-step iotas, no MXU).
    rows = jnp.sum(ssim_map, axis=0, keepdims=True)            # (1, n_img*W)
    per_img = jnp.sum(rows * sel_ref[...], axis=1)             # (n_img,)
    out_ref[...] = per_img.reshape(1, 1, n_img)


def _gaussian_1d(kernel_size, sigma):
    """torchmetrics' gaussian window, as Python floats (static kernel consts)."""
    dist = [(1 - kernel_size) / 2.0 + i for i in range(kernel_size)]
    g = [math.exp(-((d / sigma) ** 2) / 2.0) for d in dist]
    s = sum(g)
    return [v / s for v in g]


def _band_matrix(n_out, n_in, g):
    """M[r, r + j] = g[j];  M @ v == 'valid' cross-correlation (pad+crop folded)."""
    k = g.shape[0]
    row = jnp.arange(n_out)[:, None]
    col = jnp.arange(n_in)[None, :]
    off = col - row
    return jnp.where((off >= 0) & (off < k),
                     g[jnp.clip(off, 0, k - 1)],
                     jnp.float32(0.0))


def _target_lanes():
    """v5e passes are 128 wide -> 128 lanes saturates; v6e/v7x MXUs are 256 wide."""
    try:
        kind = jax.devices()[0].device_kind.lower()
    except Exception:
        return 256
    if "v5 lite" in kind or "v5e" in kind or "v5lite" in kind:
        return 128
    return 256


def _choose_batch(nc, w, target_lanes):
    """Images per grid step: b*w must be a multiple of 128; grow toward the
    per-generation lane target, but keep >=2 grid steps when possible so
    v7x's two TensorCores both get work."""
    b = 128 // math.gcd(128, w)
    while b * w < target_lanes and 2 * b <= max(1, nc // 2):
        b *= 2
    return b


def _vmem_limit_bytes(h_in, h_out, lanes, b, matmul_dtype):
    mb = jnp.dtype(matmul_dtype).itemsize
    est = (
        2 * 2 * h_in * lanes * mb            # x, y blocks, double-buffered
        + 2 * (h_out * h_in * mb)            # gh (2 buffers; tiny)
        + 2 * (b * lanes * 4)                # sel (2 buffers)
        + 5 * h_in * lanes * mb              # lane-stacked xs
        + 4 * 5 * h_out * lanes * 4          # t, roll temps, f accumulator
        + 10 * h_out * lanes * 4             # SSIM elementwise intermediates
        + 2 * b * 4                          # output blocks
    )
    est = int(est * 1.5) + (1 << 20)
    return max(32 * 1024 * 1024, min(est, 56 * 1024 * 1024))


def ssim_loss(outputs, targets, *, matmul_dtype=MATMUL_DTYPE):
    """1 - SSIM(outputs, targets); inputs are NCHW float arrays in [0, 1]."""
    N, C, H, W = outputs.shape
    pad = (KERNEL_SIZE - 1) // 2
    h_out = H - 2 * pad
    w_out = W - 2 * pad
    assert h_out > 0 and w_out > 0, "image smaller than SSIM window"
    c1 = (K1 * DATA_RANGE) ** 2
    c2 = (K2 * DATA_RANGE) ** 2

    nc = N * C
    b = _choose_batch(nc, W, _target_lanes())
    num_blocks = pl.cdiv(nc, b)
    nc_pad = num_blocks * b

    def to_lane_major(a):
        a = a.astype(matmul_dtype).reshape(nc, H, W)
        if nc_pad != nc:
            a = jnp.pad(a, ((0, nc_pad - nc), (0, 0), (0, 0)))
        # (nc_pad, H, W) -> (H, nc_pad, W) -> (H, nc_pad*W): images side-by-side
        # along the fast lane axis (layout plumbing only).
        return jnp.transpose(a, (1, 0, 2)).reshape(H, nc_pad * W)

    x2 = to_lane_major(outputs)
    y2 = to_lane_major(targets)

    g_list = _gaussian_1d(KERNEL_SIZE, SIGMA)
    g = jnp.asarray(g_list, jnp.float32)
    # Pad + crop folded: cropped conv output row r reads original rows
    # [r, r+K) only, so no reflection values are ever touched.
    gh = _band_matrix(h_out, H, g).astype(matmul_dtype)        # (h_out, H)

    # Per-image valid-column selector, hoisted out of the grid body.  Tiny, so
    # default double-buffering of this constant costs nothing.
    lane = jnp.arange(b * W)
    sel = ((lane[None, :] // W == jnp.arange(b)[:, None]) &
           (lane[None, :] % W < w_out)).astype(jnp.float32)    # (b, b*W)

    kernel = functools.partial(_ssim_kernel, n_img=b, w_in=W,
                               gauss=tuple(g_list), c1=c1, c2=c2)

    partial_sums = pl.pallas_call(
        kernel,
        out_shape=jax.ShapeDtypeStruct((num_blocks, 1, b), jnp.float32),
        grid_spec=pltpu.PrefetchScalarGridSpec(
            num_scalar_prefetch=0,
            grid=(num_blocks,),
            in_specs=[
                pl.BlockSpec((H, b * W), lambda i: (0, i)),
                pl.BlockSpec((H, b * W), lambda i: (0, i)),
                pl.BlockSpec((h_out, H), lambda i: (0, 0)),
                pl.BlockSpec((b, b * W), lambda i: (0, 0)),
            ],
            out_specs=pl.BlockSpec((1, 1, b), lambda i: (i, 0, 0)),
        ),
        compiler_params=pltpu.CompilerParams(
            dimension_semantics=("parallel",),
            vmem_limit_bytes=_vmem_limit_bytes(H, h_out, b * W, b, matmul_dtype)),
    )(x2, y2, gh, sel)

    per_image = partial_sums.reshape(nc_pad)[:nc]
    ssim_val = jnp.sum(per_image) / jnp.float32(nc * h_out * w_out)
    return jnp.float32(1.0) - ssim_val


if __name__ == "__main__":
    key = jax.random.PRNGKey(0)
    ka, kb = jax.random.split(key)
    # data_range=1.0 -> inputs in [0, 1]
    outputs = jax.random.uniform(ka, (2, 4, 16, 16), dtype=jnp.float32)
    targets = jax.random.uniform(kb, (2, 4, 16, 16), dtype=jnp.float32)

    loss = jax.block_until_ready(ssim_loss(outputs, targets))
    assert loss.shape == () and bool(jnp.isfinite(loss))
    print("KERNEL_OK")
</pallas_src>

<mosaic_0001>
module attributes {stable_mosaic.version = 11 : i64} {
  func.func @_ssim_kernel(%arg0: i32, %arg1: memref<16x128xbf16, #tpu.memory_space<vmem>>, %arg2: memref<16x128xbf16, #tpu.memory_space<vmem>>, %arg3: memref<6x16xbf16, #tpu.memory_space<vmem>>, %arg4: memref<8x128xf32, #tpu.memory_space<vmem>>, %arg5: memref<1x1x8xf32, #tpu.memory_space<vmem>>) attributes {dimension_semantics = [#tpu.dimension_semantics<parallel>], iteration_bounds = array<i64: 1>, scalar_prefetch = 0 : i64, scratch_operands = 0 : i64, tpu.core_type = #tpu.core_type<tc>, window_params = [{transform_indices = @transform_0, window_bounds = array<i64: 16, 128>}, {transform_indices = @transform_1, window_bounds = array<i64: 16, 128>}, {pipeline_mode = #tpu.pipeline_mode<synchronous>, transform_indices = @transform_2, window_bounds = array<i64: 6, 16>}, {pipeline_mode = #tpu.pipeline_mode<synchronous>, transform_indices = @transform_3, window_bounds = array<i64: 8, 128>}, {transform_indices = @transform_4, window_bounds = array<i64: 1, 1, 8>}]} {
    %c0 = arith.constant 0 : index
    %c0_0 = arith.constant 0 : index
    %0 = vector.load %arg1[%c0, %c0_0] : memref<16x128xbf16, #tpu.memory_space<vmem>>, vector<16x128xbf16>
    %c0_1 = arith.constant 0 : index
    %c0_2 = arith.constant 0 : index
    %1 = vector.load %arg2[%c0_1, %c0_2] : memref<16x128xbf16, #tpu.memory_space<vmem>>, vector<16x128xbf16>
    %2 = arith.mulf %0, %0 : vector<16x128xbf16>
    %3 = arith.mulf %1, %1 : vector<16x128xbf16>
    %4 = arith.mulf %0, %1 : vector<16x128xbf16>
    %5 = tpu.concatenate %0, %1, %2, %3, %4 in 1 : vector<16x128xbf16>, vector<16x128xbf16>, vector<16x128xbf16>, vector<16x128xbf16>, vector<16x128xbf16> -> vector<16x640xbf16>
    %c0_3 = arith.constant 0 : index
    %c0_4 = arith.constant 0 : index
    %6 = vector.load %arg3[%c0_3, %c0_4] : memref<6x16xbf16, #tpu.memory_space<vmem>>, vector<6x16xbf16>
    %cst = arith.constant dense<0.000000e+00> : vector<6x640xf32>
    %7 = tpu.matmul %6, %5, %cst {dimension_numbers = #tpu.dot_dimension_numbers<[1], [0], [0], [1], [0, 0, 1, 1], [], []>} : vector<6x16xbf16>, vector<16x640xbf16>, vector<6x640xf32> -> vector<6x640xf32>
    %cst_5 = arith.constant 0.00102838012 : f32
    %8 = vector.broadcast %cst_5 : f32 to vector<6x640xf32>
    %9 = arith.mulf %7, %8 : vector<6x640xf32>
    %c639_i32 = arith.constant 639 : i32
    %10 = tpu.dynamic_rotate %7 by %c639_i32 dim 1 : vector<6x640xf32>, i32 -> vector<6x640xf32>
    %cst_6 = arith.constant 0.00759875821 : f32
    %11 = vector.broadcast %cst_6 : f32 to vector<6x640xf32>
    %12 = arith.mulf %11, %10 : vector<6x640xf32>
    %13 = arith.addf %9, %12 : vector<6x640xf32>
    %c638_i32 = arith.constant 638 : i32
    %14 = tpu.dynamic_rotate %7 by %c638_i32 dim 1 : vector<6x640xf32>, i32 -> vector<6x640xf32>
    %cst_7 = arith.constant 0.0360007733 : f32
    %15 = vector.broadcast %cst_7 : f32 to vector<6x640xf32>
    %16 = arith.mulf %15, %14 : vector<6x640xf32>
    %17 = arith.addf %13, %16 : vector<6x640xf32>
    %c637_i32 = arith.constant 637 : i32
    %18 = tpu.dynamic_rotate %7 by %c637_i32 dim 1 : vector<6x640xf32>, i32 -> vector<6x640xf32>
    %cst_8 = arith.constant 0.109360687 : f32
    %19 = vector.broadcast %cst_8 : f32 to vector<6x640xf32>
    %20 = arith.mulf %19, %18 : vector<6x640xf32>
    %21 = arith.addf %17, %20 : vector<6x640xf32>
    %c636_i32 = arith.constant 636 : i32
    %22 = tpu.dynamic_rotate %7 by %c636_i32 dim 1 : vector<6x640xf32>, i32 -> vector<6x640xf32>
    %cst_9 = arith.constant 0.213005543 : f32
    %23 = vector.broadcast %cst_9 : f32 to vector<6x640xf32>
    %24 = arith.mulf %23, %22 : vector<6x640xf32>
    %25 = arith.addf %21, %24 : vector<6x640xf32>
    %c635_i32 = arith.constant 635 : i32
    %26 = tpu.dynamic_rotate %7 by %c635_i32 dim 1 : vector<6x640xf32>, i32 -> vector<6x640xf32>
    %cst_10 = arith.constant 0.266011715 : f32
    %27 = vector.broadcast %cst_10 : f32 to vector<6x640xf32>
    %28 = arith.mulf %27, %26 : vector<6x640xf32>
    %29 = arith.addf %25, %28 : vector<6x640xf32>
    %c634_i32 = arith.constant 634 : i32
    %30 = tpu.dynamic_rotate %7 by %c634_i32 dim 1 : vector<6x640xf32>, i32 -> vector<6x640xf32>
    %cst_11 = arith.constant 0.213005543 : f32
    %31 = vector.broadcast %cst_11 : f32 to vector<6x640xf32>
    %32 = arith.mulf %31, %30 : vector<6x640xf32>
    %33 = arith.addf %29, %32 : vector<6x640xf32>
    %c633_i32 = arith.constant 633 : i32
    %34 = tpu.dynamic_rotate %7 by %c633_i32 dim 1 : vector<6x640xf32>, i32 -> vector<6x640xf32>
    %cst_12 = arith.constant 0.109360687 : f32
    %35 = vector.broadcast %cst_12 : f32 to vector<6x640xf32>
    %36 = arith.mulf %35, %34 : vector<6x640xf32>
    %37 = arith.addf %33, %36 : vector<6x640xf32>
    %c632_i32 = arith.constant 632 : i32
    %38 = tpu.dynamic_rotate %7 by %c632_i32 dim 1 : vector<6x640xf32>, i32 -> vector<6x640xf32>
    %cst_13 = arith.constant 0.0360007733 : f32
    %39 = vector.broadcast %cst_13 : f32 to vector<6x640xf32>
    %40 = arith.mulf %39, %38 : vector<6x640xf32>
    %41 = arith.addf %37, %40 : vector<6x640xf32>
    %c631_i32 = arith.constant 631 : i32
    %42 = tpu.dynamic_rotate %7 by %c631_i32 dim 1 : vector<6x640xf32>, i32 -> vector<6x640xf32>
    %cst_14 = arith.constant 0.00759875821 : f32
    %43 = vector.broadcast %cst_14 : f32 to vector<6x640xf32>
    %44 = arith.mulf %43, %42 : vector<6x640xf32>
    %45 = arith.addf %41, %44 : vector<6x640xf32>
    %c630_i32 = arith.constant 630 : i32
    %46 = tpu.dynamic_rotate %7 by %c630_i32 dim 1 : vector<6x640xf32>, i32 -> vector<6x640xf32>
    %cst_15 = arith.constant 0.00102838012 : f32
    %47 = vector.broadcast %cst_15 : f32 to vector<6x640xf32>
    %48 = arith.mulf %47, %46 : vector<6x640xf32>
    %49 = arith.addf %45, %48 : vector<6x640xf32>
    %50 = vector.extract_strided_slice %49 {offsets = [0, 0], sizes = [6, 128], strides = [1, 1]} : vector<6x640xf32> to vector<6x128xf32>
    %51 = vector.extract_strided_slice %49 {offsets = [0, 128], sizes = [6, 128], strides = [1, 1]} : vector<6x640xf32> to vector<6x128xf32>
    %52 = vector.extract_strided_slice %49 {offsets = [0, 256], sizes = [6, 128], strides = [1, 1]} : vector<6x640xf32> to vector<6x128xf32>
    %53 = vector.extract_strided_slice %49 {offsets = [0, 384], sizes = [6, 128], strides = [1, 1]} : vector<6x640xf32> to vector<6x128xf32>
    %54 = vector.extract_strided_slice %49 {offsets = [0, 512], sizes = [6, 128], strides = [1, 1]} : vector<6x640xf32> to vector<6x128xf32>
    %55 = arith.mulf %50, %50 : vector<6x128xf32>
    %56 = arith.mulf %51, %51 : vector<6x128xf32>
    %57 = arith.mulf %50, %51 : vector<6x128xf32>
    %58 = arith.subf %52, %55 : vector<6x128xf32>
    %59 = arith.subf %53, %56 : vector<6x128xf32>
    %60 = arith.subf %54, %57 : vector<6x128xf32>
    %cst_16 = arith.constant 2.000000e+00 : f32
    %61 = vector.broadcast %cst_16 : f32 to vector<6x128xf32>
    %62 = arith.mulf %61, %57 : vector<6x128xf32>
    %cst_17 = arith.constant 9.99999974E-5 : f32
    %63 = vector.broadcast %cst_17 : f32 to vector<6x128xf32>
    %64 = arith.addf %62, %63 : vector<6x128xf32>
    %cst_18 = arith.constant 2.000000e+00 : f32
    %65 = vector.broadcast %cst_18 : f32 to vector<6x128xf32>
    %66 = arith.mulf %65, %60 : vector<6x128xf32>
    %cst_19 = arith.constant 8.99999984E-4 : f32
    %67 = vector.broadcast %cst_19 : f32 to vector<6x128xf32>
    %68 = arith.addf %66, %67 : vector<6x128xf32>
    %69 = arith.mulf %64, %68 : vector<6x128xf32>
    %70 = arith.addf %55, %56 : vector<6x128xf32>
    %cst_20 = arith.constant 9.99999974E-5 : f32
    %71 = vector.broadcast %cst_20 : f32 to vector<6x128xf32>
    %72 = arith.addf %70, %71 : vector<6x128xf32>
    %73 = arith.addf %58, %59 : vector<6x128xf32>
    %cst_21 = arith.constant 8.99999984E-4 : f32
    %74 = vector.broadcast %cst_21 : f32 to vector<6x128xf32>
    %75 = arith.addf %73, %74 : vector<6x128xf32>
    %76 = arith.mulf %72, %75 : vector<6x128xf32>
    %cst_22 = arith.constant 9.99999968E-21 : f32
    %77 = vector.broadcast %cst_22 : f32 to vector<6x128xf32>
    %78 = arith.maximumf %76, %77 : vector<6x128xf32>
    %79 = arith.divf %69, %78 : vector<6x128xf32>
    %cst_23 = arith.constant dense<0.000000e+00> : vector<128xf32>
    %80 = vector.multi_reduction <add>, %79, %cst_23 [0] : vector<6x128xf32> to vector<128xf32>
    %81 = vector.shape_cast %80 : vector<128xf32> to vector<1x128xf32>
    %c0_24 = arith.constant 0 : index
    %c0_25 = arith.constant 0 : index
    %82 = vector.load %arg4[%c0_24, %c0_25] : memref<8x128xf32, #tpu.memory_space<vmem>>, vector<8x128xf32>
    %83 = vector.broadcast %81 : vector<1x128xf32> to vector<8x128xf32>
    %84 = arith.mulf %83, %82 : vector<8x128xf32>
    %cst_26 = arith.constant dense<0.000000e+00> : vector<8xf32>
    %85 = vector.multi_reduction <add>, %84, %cst_26 [1] : vector<8x128xf32> to vector<8xf32>
    %86 = vector.shape_cast %85 : vector<8xf32> to vector<1x1x8xf32>
    %c0_27 = arith.constant 0 : index
    %c0_28 = arith.constant 0 : index
    %c0_29 = arith.constant 0 : index
    %87 = vector.load %arg5[%c0_27, %c0_28, %c0_29] : memref<1x1x8xf32, #tpu.memory_space<vmem>>, vector<1x1x8xf32>
    tpu.vector_store %arg5[%c0_27, %c0_28, %c0_29], %86 {strides = array<i32>} : memref<1x1x8xf32, #tpu.memory_space<vmem>>, vector<1x1x8xf32>,
    return
  }
  func.func @transform_0(%arg0: i32) -> (i32, i32) {
    %c0_i32 = arith.constant 0 : i32
    %c0_i32_0 = arith.constant 0 : i32
    return %c0_i32, %arg0 : i32, i32
  }
  func.func @transform_1(%arg0: i32) -> (i32, i32) {
    %c0_i32 = arith.constant 0 : i32
    %c0_i32_0 = arith.constant 0 : i32
    return %c0_i32, %arg0 : i32, i32
  }
  func.func @transform_2(%arg0: i32) -> (i32, i32) {
    %c0_i32 = arith.constant 0 : i32
    %c0_i32_0 = arith.constant 0 : i32
    %c0_i32_1 = arith.constant 0 : i32
    return %c0_i32, %c0_i32_0 : i32, i32
  }
  func.func @transform_3(%arg0: i32) -> (i32, i32) {
    %c0_i32 = arith.constant 0 : i32
    %c0_i32_0 = arith.constant 0 : i32
    %c0_i32_1 = arith.constant 0 : i32
    return %c0_i32, %c0_i32_0 : i32, i32
  }
  func.func @transform_4(%arg0: i32) -> (i32, i32, i32) {
    %c0_i32 = arith.constant 0 : i32
    %c0_i32_0 = arith.constant 0 : i32
    %c0_i32_1 = arith.constant 0 : i32
    return %arg0, %c0_i32, %c0_i32_0 : i32, i32, i32
  }
}

</mosaic_0001>

<llo_original>
// kernel: tpu_custom_call.1
$region0: #{tpu_custom_call.1}
  #allocation0 [shape = 'u32[]', space=smem, size = 0x4, offset = 0x4, fixed_abs, tag = 'smem constant byte address 0x4 - core index']
  #allocation1 [shape = 'u32[144,128]{1,0:T(1,128)}', space=vmem, size = 0x12000, scoped, tag = 'internal scratch']
  %s0 = inlined_call_operand.hbm [shape: bf16[16,128], index: 0, kind: input, shape index: {}]
  %s1 = inlined_call_operand.hbm [shape: bf16[16,128], index: 1, kind: input, shape index: {}]
  %s2 = inlined_call_operand.hbm [shape: bf16[6,16], index: 2, kind: input, shape index: {}]
  %s3 = inlined_call_operand.vmem [shape: f32[8,128], index: 3, kind: input, shape index: {}]
  %s4 = inlined_call_operand.hbm [shape: f32[1,1,8], index: 4, kind: output, shape index: {}]
  %s5 = sld [smem:[#allocation0]]
  $region38: #{tpu_custom_call.1} parent=0
    _
  %s7 = ssub.s32 1, %s5
  %s8 = scalar_select 0, %s7, %s5
  $region1: #{tpu_custom_call.1} parent=0
    #allocation2 [shape = 'u8[4096]{0}', space=vmem, size = 0x1000, scoped, tag = 'input window, operand 0, single buffered']
    #allocation3 [shape = 's32[1]{0}', space=sflag, size = 0x4, scoped, tag = 'scoped memory for tpu_custom_call.1']
    #allocation4 [shape = 's32[1]{0}', space=sflag, size = 0x4, scoped, tag = 'scoped memory for tpu_custom_call.1']
    #allocation5 [shape = 'u8[4096]{0}', space=vmem, size = 0x1000, scoped, tag = 'input window, operand 1, single buffered']
    #allocation6 [shape = 's32[1]{0}', space=sflag, size = 0x4, scoped, tag = 'scoped memory for tpu_custom_call.1']
    #allocation7 [shape = 'u8[2048]{0}', space=vmem, size = 0x800, scoped, tag = 'input window, operand 2, single buffered']
    #allocation8 [shape = 'u8[512]{0}', space=vmem, size = 0x400, scoped, tag = 'output window, operand 0, single buffered']
    %9 = vsyncpa [#allocation3], 0
    %10 = vsyncpa [#allocation6], 0
    %11 = vsyncpa [#allocation4], 0
    // Predicated region
    $region2: #{tpu_custom_call.1} parent=1 // pred_check
      _
    $region3: #{tpu_custom_call.1} parent=1 // pred_check_branch
      %13 = sbr.rel (0) target = $region5
    $region4: #{tpu_custom_call.1} parent=1 // pred_region
      %s15 = ssub.s32 128, 128
      %16 = vsyncadd [#allocation3], %s15
      %s17 = sshll.u32 [#allocation2], 4
      %s18 = int_to_ptr.vmem [resolvable:$true] %s17
      %23 = dma.hbm_to_vmem [thread:$0]  %s0, 128, %s18, [#allocation3], 64, 64, 4
    $region5: #{tpu_custom_call.1} parent=1 // pred_fallthru
      _
    // Predicated region
    $region6: #{tpu_custom_call.1} parent=1 // pred_check
      _
    $region7: #{tpu_custom_call.1} parent=1 // pred_check_branch
      %25 = sbr.rel (0) target = $region9
    $region8: #{tpu_custom_call.1} parent=1 // pred_region
      %s27 = ssub.s32 128, 128
      %28 = vsyncadd [#allocation6], %s27
      %s29 = sshll.u32 [#allocation5], 4
      %s30 = int_to_ptr.vmem [resolvable:$true] %s29
      %35 = dma.hbm_to_vmem [thread:$0]  %s1, 128, %s30, [#allocation6], 64, 64, 4
    $region9: #{tpu_custom_call.1} parent=1 // pred_fallthru
      _
    // Predicated region
    $region10: #{tpu_custom_call.1} parent=1 // pred_check
      _
    $region11: #{tpu_custom_call.1} parent=1 // pred_check_branch
      %37 = sbr.rel (0) target = $region13
    $region12: #{tpu_custom_call.1} parent=1 // pred_region
      %s39 = ssub.s32 64, 64
      %40 = vsyncadd [#allocation6], %s39
      %s42 = sshll.u32 [#allocation7], 4
      %s43 = int_to_ptr.vmem [resolvable:$true] %s42
      %45 = dma.hbm_to_vmem [thread:$0]  %s2, 64, %s43, [#allocation6]
    $region13: #{tpu_custom_call.1} parent=1 // pred_fallthru
      _
    // Predicated region
    $region14: #{tpu_custom_call.1} parent=1 // pred_check
      _
    $region15: #{tpu_custom_call.1} parent=1 // pred_check_branch
      %47 = sbr.rel (0) target = $region17
    $region16: #{tpu_custom_call.1} parent=1 // pred_region
      _
    $region17: #{tpu_custom_call.1} parent=1 // pred_fallthru
      _
    // Predicated region
    $region18: #{tpu_custom_call.1} parent=1 // pred_check
      _
    $region19: #{tpu_custom_call.1} parent=1 // pred_check_branch
      %49 = sbr.rel (0) target = $region21
    $region20: #{tpu_custom_call.1} parent=1 // pred_region
      %50 = dma.done [#allocation3], 128
    $region21: #{tpu_custom_call.1} parent=1 // pred_fallthru
      _
    // Predicated region
    $region22: #{tpu_custom_call.1} parent=1 // pred_check
      _
    $region23: #{tpu_custom_call.1} parent=1 // pred_check_branch
      %52 = sbr.rel (0) target = $region25
    $region24: #{tpu_custom_call.1} parent=1 // pred_region
      %53 = dma.done [#allocation6], 128
    $region25: #{tpu_custom_call.1} parent=1 // pred_fallthru
      _
    // Predicated region
    $region26: #{tpu_custom_call.1} parent=1 // pred_check
      _
    $region27: #{tpu_custom_call.1} parent=1 // pred_check_branch
      %55 = sbr.rel (0) target = $region29
    $region28: #{tpu_custom_call.1} parent=1 // pred_region
      %56 = dma.done [#allocation6], 64
    $region29: #{tpu_custom_call.1} parent=1 // pred_fallthru
      _
    %v58 = vld [vmem:[#allocation2] sm:$0xf]
    %v59 = vld [vmem:[#allocation2 + $0x4] sm:$0xf]
    %v60 = vld [vmem:[#allocation5] sm:$0xf]
    %v61 = vld [vmem:[#allocation5 + $0x4] sm:$0xf]
    %v62 = vmul.bf16 %v58, %v58
    %v63 = vmul.bf16 %v59, %v59
    %v64 = vmul.bf16 %v60, %v60
    %v65 = vmul.bf16 %v61, %v61
    %v66 = vmul.bf16 %v58, %v60
    %v67 = vmul.bf16 %v59, %v61
    %v70 = vunpack.c.l.b16 %v58
    %v71 = vunpack.c.l.b16 %v59
    %v72 = vpack.c.b16 %v71, %v70
    %v76 = vunpack.c.l.b16 %v60
    %v77 = vunpack.c.l.b16 %v61
    %v78 = vpack.c.b16 %v77, %v76
    %v82 = vunpack.c.l.b16 %v62
    %v83 = vunpack.c.l.b16 %v63
    %v84 = vpack.c.b16 %v83, %v82
    %v88 = vunpack.c.l.b16 %v64
    %v89 = vunpack.c.l.b16 %v65
    %v90 = vpack.c.b16 %v89, %v88
    %v94 = vunpack.c.l.b16 %v66
    %v95 = vunpack.c.l.b16 %v67
    %v96 = vpack.c.b16 %v95, %v94
    %v98 = vld [vmem:[#allocation7] sm:$0x7]
    %vm99 = vcmask 130048
    %v101 = vsel %vm99, %v98, 0
    %103 = vmatprep.subr.bf16.mxu0 %v78
    %104 = vmatpush1.bf16.msra.mxu0 %v72
    %105 = vmatprep.subr.bf16.mxu0 0
    %106 = vmatpush1.bf16.msra.mxu0 0
    %107 = vmatprep.subr.bf16.mxu0 0
    %108 = vmatpush1.bf16.msra.mxu0 0
    %109 = vmatprep.subr.bf16.mxu0 0
    %110 = vmatpush1.bf16.msra.mxu0 0
    %111 = vmatprep.subr.bf16.mxu0 0
    %112 = vmatpush1.bf16.msra.mxu0 0
    %113 = vmatprep.subr.bf16.mxu0 0
    %114 = vmatpush1.bf16.msra.mxu0 0
    %115 = vmatprep.subr.bf16.mxu0 0
    %116 = vmatpush1.bf16.msra.mxu0 0
    %117 = vmatprep.subr.bf16.mxu0 0
    %118 = vmatpush1.bf16.msra.mxu0 0
    %119 = vmatprep.subr.bf16.mxu0 0
    %120 = vmatpush1.bf16.msra.mxu0 0
    %121 = vmatprep.subr.bf16.mxu0 0
    %122 = vmatpush1.bf16.msra.mxu0 0
    %123 = vmatprep.subr.bf16.mxu0 0
    %124 = vmatpush1.bf16.msra.mxu0 0
    %125 = vmatprep.subr.bf16.mxu0 0
    %126 = vmatpush1.bf16.msra.mxu0 0
    %127 = vmatprep.subr.bf16.mxu0 0
    %128 = vmatpush1.bf16.msra.mxu0 0
    %129 = vmatprep.subr.bf16.mxu0 0
    %130 = vmatpush1.bf16.msra.mxu0 0
    %131 = vmatprep.subr.bf16.mxu0 0
    %132 = vmatpush1.bf16.msra.mxu0 0
    %133 = vmatprep.subr.bf16.mxu0 0
    %134 = vmatpush1.bf16.msra.mxu0 0
    %135 = vmatprep.mubr.bf16.mxu0 0
    %136 = vmatmul.mubr.bf16.gmra.mrb[0].mxu0 %v101
    %v137 = vpop.f32.mrb[0].mxu0
    %v138 = vadd.f32 0.0, %v137
    %v139 = vpop.f32.mrb[0].mxu0
    %v140 = vadd.f32 0.0, %v139
    %v141 = vpop.f32.mrb[0].mxu0
    %v142 = vpop.f32.mrb[0].mxu0
    %143 = vdwg.mxu0
    %144 = vmatprep.subr.bf16.mxu0 %v90
    %145 = vmatpush1.bf16.msra.mxu0 %v84
    %146 = vmatprep.subr.bf16.mxu0 0
    %147 = vmatpush1.bf16.msra.mxu0 0
    %148 = vmatprep.subr.bf16.mxu0 0
    %149 = vmatpush1.bf16.msra.mxu0 0
    %150 = vmatprep.subr.bf16.mxu0 0
    %151 = vmatpush1.bf16.msra.mxu0 0
    %152 = vmatprep.subr.bf16.mxu0 0
    %153 = vmatpush1.bf16.msra.mxu0 0
    %154 = vmatprep.subr.bf16.mxu0 0
    %155 = vmatpush1.bf16.msra.mxu0 0
    %156 = vmatprep.subr.bf16.mxu0 0
    %157 = vmatpush1.bf16.msra.mxu0 0
    %158 = vmatprep.subr.bf16.mxu0 0
    %159 = vmatpush1.bf16.msra.mxu0 0
    %160 = vmatprep.subr.bf16.mxu0 0
    %161 = vmatpush1.bf16.msra.mxu0 0
    %162 = vmatprep.subr.bf16.mxu0 0
    %163 = vmatpush1.bf16.msra.mxu0 0
    %164 = vmatprep.subr.bf16.mxu0 0
    %165 = vmatpush1.bf16.msra.mxu0 0
    %166 = vmatprep.subr.bf16.mxu0 0
    %167 = vmatpush1.bf16.msra.mxu0 0
    %168 = vmatprep.subr.bf16.mxu0 0
    %169 = vmatpush1.bf16.msra.mxu0 0
    %170 = vmatprep.subr.bf16.mxu0 0
    %171 = vmatpush1.bf16.msra.mxu0 0
    %172 = vmatprep.subr.bf16.mxu0 0
    %173 = vmatpush1.bf16.msra.mxu0 0
    %174 = vmatprep.subr.bf16.mxu0 0
    %175 = vmatpush1.bf16.msra.mxu0 0
    %176 = vmatprep.mubr.bf16.mxu0 0
    %177 = vmatmul.mubr.bf16.gmra.mrb[0].mxu0 %v101
    %v178 = vpop.f32.mrb[0].mxu0
    %v179 = vadd.f32 0.0, %v178
    %v180 = vpop.f32.mrb[0].mxu0
    %v181 = vadd.f32 0.0, %v180
    %v182 = vpop.f32.mrb[0].mxu0
    %v183 = vpop.f32.mrb[0].mxu0
    %184 = vdwg.mxu0
    %185 = vmatprep.subr.bf16.mxu0 0
    %186 = vmatpush1.bf16.msra.mxu0 %v96
    %187 = vmatprep.subr.bf16.mxu0 0
    %188 = vmatpush1.bf16.msra.mxu0 0
    %189 = vmatprep.subr.bf16.mxu0 0
    %190 = vmatpush1.bf16.msra.mxu0 0
    %191 = vmatprep.subr.bf16.mxu0 0
    %192 = vmatpush1.bf16.msra.mxu0 0
    %193 = vmatprep.subr.bf16.mxu0 0
    %194 = vmatpush1.bf16.msra.mxu0 0
    %195 = vmatprep.subr.bf16.mxu0 0
    %196 = vmatpush1.bf16.msra.mxu0 0
    %197 = vmatprep.subr.bf16.mxu0 0
    %198 = vmatpush1.bf16.msra.mxu0 0
    %199 = vmatprep.subr.bf16.mxu0 0
    %200 = vmatpush1.bf16.msra.mxu0 0
    %201 = vmatprep.subr.bf16.mxu0 0
    %202 = vmatpush1.bf16.msra.mxu0 0
    %203 = vmatprep.subr.bf16.mxu0 0
    %204 = vmatpush1.bf16.msra.mxu0 0
    %205 = vmatprep.subr.bf16.mxu0 0
    %206 = vmatpush1.bf16.msra.mxu0 0
    %207 = vmatprep.subr.bf16.mxu0 0
    %208 = vmatpush1.bf16.msra.mxu0 0
    %209 = vmatprep.subr.bf16.mxu0 0
    %210 = vmatpush1.bf16.msra.mxu0 0
    %211 = vmatprep.subr.bf16.mxu0 0
    %212 = vmatpush1.bf16.msra.mxu0 0
    %213 = vmatprep.subr.bf16.mxu0 0
    %214 = vmatpush1.bf16.msra.mxu0 0
    %215 = vmatprep.subr.bf16.mxu0 0
    %216 = vmatpush1.bf16.msra.mxu0 0
    %217 = vmatprep.mubr.bf16.mxu0 0
    %218 = vmatmul.mubr.bf16.gmra.mrb[0].mxu0 %v101
    %v219 = vpop.f32.mrb[0].mxu0
    %v220 = vadd.f32 0.0, %v219
    %v221 = vpop.f32.mrb[0].mxu0
    %v222 = vpop.f32.mrb[0].mxu0
    %v223 = vpop.f32.mrb[0].mxu0
    %224 = vdwg.mxu0
    %v225 = vmul.f32 %v138, 0.0010283801
    %v226 = vmul.f32 %v140, 0.0010283801
    %v227 = vmul.f32 %v179, 0.0010283801
    %v228 = vmul.f32 %v181, 0.0010283801
    %v229 = vmul.f32 %v220, 0.0010283801
    %230 = vrot.lane.b32.xlu0 %v138, 127
    %v231 = vpop.permute.xlu0 %230
    %232 = vrot.lane.b32.xlu0 %v140, 127
    %v233 = vpop.permute.xlu0 %232
    %234 = vrot.lane.b32.xlu0 %v179, 127
    %v235 = vpop.permute.xlu0 %234
    %236 = vrot.lane.b32.xlu0 %v181, 127
    %v237 = vpop.permute.xlu0 %236
    %238 = vrot.lane.b32.xlu0 %v220, 127
    %v239 = vpop.permute.xlu0 %238
    %v240 = vlaneseq
    %v241 = vand.u32 %v240, 127
    %vm242 = vcmp.lt.s32.totalorder %v241, 127
    %v243 = vsel %vm242, %v237, %v239
    %v244 = vsel %vm242, %v235, %v237
    %v245 = vsel %vm242, %v233, %v235
    %v246 = vsel %vm242, %v231, %v233
    %v247 = vsel %vm242, %v239, %v231
    %v248 = vmul.f32 %v246, 0.007598758
    %v249 = vmul.f32 %v245, 0.007598758
    %v250 = vmul.f32 %v244, 0.007598758
    %v251 = vmul.f32 %v243, 0.007598758
    %v252 = vmul.f32 %v247, 0.007598758
    %v253 = vadd.f32 %v225, %v248
    %v254 = vadd.f32 %v226, %v249
    %v255 = vadd.f32 %v227, %v250
    %v256 = vadd.f32 %v228, %v251
    %v257 = vadd.f32 %v229, %v252
    %258 = vrot.lane.b32.xlu0 %v138, 126
    %v259 = vpop.permute.xlu0 %258
    %260 = vrot.lane.b32.xlu0 %v140, 126
    %v261 = vpop.permute.xlu0 %260
    %262 = vrot.lane.b32.xlu0 %v179, 126
    %v263 = vpop.permute.xlu0 %262
    %264 = vrot.lane.b32.xlu0 %v181, 126
    %v265 = vpop.permute.xlu0 %264
    %266 = vrot.lane.b32.xlu0 %v220, 126
    %v267 = vpop.permute.xlu0 %266
    %vm268 = vcmp.lt.s32.totalorder %v241, 126
    %v269 = vsel %vm268, %v265, %v267
    %v270 = vsel %vm268, %v263, %v265
    %v271 = vsel %vm268, %v261, %v263
    %v272 = vsel %vm268, %v259, %v261
    %v273 = vsel %vm268, %v267, %v259
    %v274 = vmul.f32 %v272, 0.036000773
    %v275 = vmul.f32 %v271, 0.036000773
    %v276 = vmul.f32 %v270, 0.036000773
    %v277 = vmul.f32 %v269, 0.036000773
    %v278 = vmul.f32 %v273, 0.036000773
    %v279 = vadd.f32 %v253, %v274
    %v280 = vadd.f32 %v254, %v275
    %v281 = vadd.f32 %v255, %v276
    %v282 = vadd.f32 %v256, %v277
    %v283 = vadd.f32 %v257, %v278
    %284 = vrot.lane.b32.xlu0 %v138, 125
    %v285 = vpop.permute.xlu0 %284
    %286 = vrot.lane.b32.xlu0 %v140, 125
    %v287 = vpop.permute.xlu0 %286
    %288 = vrot.lane.b32.xlu0 %v179, 125
    %v289 = vpop.permute.xlu0 %288
    %290 = vrot.lane.b32.xlu0 %v181, 125
    %v291 = vpop.permute.xlu0 %290
    %292 = vrot.lane.b32.xlu0 %v220, 125
    %v293 = vpop.permute.xlu0 %292
    %vm294 = vcmp.lt.s32.totalorder %v241, 125
    %v295 = vsel %vm294, %v291, %v293
    %v296 = vsel %vm294, %v289, %v291
    %v297 = vsel %vm294, %v287, %v289
    %v298 = vsel %vm294, %v285, %v287
    %v299 = vsel %vm294, %v293, %v285
    %v300 = vmul.f32 %v298, 0.10936069
    %v301 = vmul.f32 %v297, 0.10936069
    %v302 = vmul.f32 %v296, 0.10936069
    %v303 = vmul.f32 %v295, 0.10936069
    %v304 = vmul.f32 %v299, 0.10936069
    %v305 = vadd.f32 %v279, %v300
    %v306 = vadd.f32 %v280, %v301
    %v307 = vadd.f32 %v281, %v302
    %v308 = vadd.f32 %v282, %v303
    %v309 = vadd.f32 %v283, %v304
    %310 = vrot.lane.b32.xlu0 %v138, 124
    %v311 = vpop.permute.xlu0 %310
    %312 = vrot.lane.b32.xlu0 %v140, 124
    %v313 = vpop.permute.xlu0 %312
    %314 = vrot.lane.b32.xlu0 %v179, 124
    %v315 = vpop.permute.xlu0 %314
    %316 = vrot.lane.b32.xlu0 %v181, 124
    %v317 = vpop.permute.xlu0 %316
    %318 = vrot.lane.b32.xlu0 %v220, 124
    %v319 = vpop.permute.xlu0 %318
    %vm320 = vcmp.lt.s32.totalorder %v241, 124
    %v321 = vsel %vm320, %v317, %v319
    %v322 = vsel %vm320, %v315, %v317
    %v323 = vsel %vm320, %v313, %v315
    %v324 = vsel %vm320, %v311, %v313
    %v325 = vsel %vm320, %v319, %v311
    %v326 = vmul.f32 %v324, 0.21300554
    %v327 = vmul.f32 %v323, 0.21300554
    %v328 = vmul.f32 %v322, 0.21300554
    %v329 = vmul.f32 %v321, 0.21300554
    %v330 = vmul.f32 %v325, 0.21300554
    %v331 = vadd.f32 %v305, %v326
    %v332 = vadd.f32 %v306, %v327
    %v333 = vadd.f32 %v307, %v328
    %v334 = vadd.f32 %v308, %v329
    %v335 = vadd.f32 %v309, %v330
    %336 = vrot.lane.b32.xlu0 %v138, 123
    %v337 = vpop.permute.xlu0 %336
    %338 = vrot.lane.b32.xlu0 %v140, 123
    %v339 = vpop.permute.xlu0 %338
    %340 = vrot.lane.b32.xlu0 %v179, 123
    %v341 = vpop.permute.xlu0 %340
    %342 = vrot.lane.b32.xlu0 %v181, 123
    %v343 = vpop.permute.xlu0 %342
    %344 = vrot.lane.b32.xlu0 %v220, 123
    %v345 = vpop.permute.xlu0 %344
    %vm346 = vcmp.lt.s32.totalorder %v241, 123
    %v347 = vsel %vm346, %v343, %v345
    %v348 = vsel %vm346, %v341, %v343
    %v349 = vsel %vm346, %v339, %v341
    %v350 = vsel %vm346, %v337, %v339
    %v351 = vsel %vm346, %v345, %v337
    %v352 = vmul.f32 %v350, 0.26601171
    %v353 = vmul.f32 %v349, 0.26601171
    %v354 = vmul.f32 %v348, 0.26601171
    %v355 = vmul.f32 %v347, 0.26601171
    %v356 = vmul.f32 %v351, 0.26601171
    %v357 = vadd.f32 %v331, %v352
    %v358 = vadd.f32 %v332, %v353
    %v359 = vadd.f32 %v333, %v354
    %v360 = vadd.f32 %v334, %v355
    %v361 = vadd.f32 %v335, %v356
    %362 = vrot.lane.b32.xlu0 %v138, 122
    %v363 = vpop.permute.xlu0 %362
    %364 = vrot.lane.b32.xlu0 %v140, 122
    %v365 = vpop.permute.xlu0 %364
    %366 = vrot.lane.b32.xlu0 %v179, 122
    %v367 = vpop.permute.xlu0 %366
    %368 = vrot.lane.b32.xlu0 %v181, 122
    %v369 = vpop.permute.xlu0 %368
    %370 = vrot.lane.b32.xlu0 %v220, 122
    %v371 = vpop.permute.xlu0 %370
    %vm372 = vcmp.lt.s32.totalorder %v241, 122
    %v373 = vsel %vm372, %v369, %v371
    %v374 = vsel %vm372, %v367, %v369
    %v375 = vsel %vm372, %v365, %v367
    %v376 = vsel %vm372, %v363, %v365
    %v377 = vsel %vm372, %v371, %v363
    %v378 = vmul.f32 %v376, 0.21300554
    %v379 = vmul.f32 %v375, 0.21300554
    %v380 = vmul.f32 %v374, 0.21300554
    %v381 = vmul.f32 %v373, 0.21300554
    %v382 = vmul.f32 %v377, 0.21300554
    %v383 = vadd.f32 %v357, %v378
    %v384 = vadd.f32 %v358, %v379
    %v385 = vadd.f32 %v359, %v380
    %v386 = vadd.f32 %v360, %v381
    %v387 = vadd.f32 %v361, %v382
    %388 = vrot.lane.b32.xlu0 %v138, 121
    %v389 = vpop.permute.xlu0 %388
    %390 = vrot.lane.b32.xlu0 %v140, 121
    %v391 = vpop.permute.xlu0 %390
    %392 = vrot.lane.b32.xlu0 %v179, 121
    %v393 = vpop.permute.xlu0 %392
    %394 = vrot.lane.b32.xlu0 %v181, 121
    %v395 = vpop.permute.xlu0 %394
    %396 = vrot.lane.b32.xlu0 %v220, 121
    %v397 = vpop.permute.xlu0 %396
    %vm398 = vcmp.lt.s32.totalorder %v241, 121
    %v399 = vsel %vm398, %v395, %v397
    %v400 = vsel %vm398, %v393, %v395
    %v401 = vsel %vm398, %v391, %v393
    %v402 = vsel %vm398, %v389, %v391
    %v403 = vsel %vm398, %v397, %v389
    %v404 = vmul.f32 %v402, 0.10936069
    %v405 = vmul.f32 %v401, 0.10936069
    %v406 = vmul.f32 %v400, 0.10936069
    %v407 = vmul.f32 %v399, 0.10936069
    %v408 = vmul.f32 %v403, 0.10936069
    %v409 = vadd.f32 %v383, %v404
    %v410 = vadd.f32 %v384, %v405
    %v411 = vadd.f32 %v385, %v406
    %v412 = vadd.f32 %v386, %v407
    %v413 = vadd.f32 %v387, %v408
    %414 = vrot.lane.b32.xlu0 %v138, 120
    %v415 = vpop.permute.xlu0 %414
    %416 = vrot.lane.b32.xlu0 %v140, 120
    %v417 = vpop.permute.xlu0 %416
    %418 = vrot.lane.b32.xlu0 %v179, 120
    %v419 = vpop.permute.xlu0 %418
    %420 = vrot.lane.b32.xlu0 %v181, 120
    %v421 = vpop.permute.xlu0 %420
    %422 = vrot.lane.b32.xlu0 %v220, 120
    %v423 = vpop.permute.xlu0 %422
    %vm424 = vcmp.lt.s32.totalorder %v241, 120
    %v425 = vsel %vm424, %v421, %v423
    %v426 = vsel %vm424, %v419, %v421
    %v427 = vsel %vm424, %v417, %v419
    %v428 = vsel %vm424, %v415, %v417
    %v429 = vsel %vm424, %v423, %v415
    %v430 = vmul.f32 %v428, 0.036000773
    %v431 = vmul.f32 %v427, 0.036000773
    %v432 = vmul.f32 %v426, 0.036000773
    %v433 = vmul.f32 %v425, 0.036000773
    %v434 = vmul.f32 %v429, 0.036000773
    %v435 = vadd.f32 %v409, %v430
    %v436 = vadd.f32 %v410, %v431
    %v437 = vadd.f32 %v411, %v432
    %v438 = vadd.f32 %v412, %v433
    %v439 = vadd.f32 %v413, %v434
    %440 = vrot.lane.b32.xlu0 %v138, 119
    %v441 = vpop.permute.xlu0 %440
    %442 = vrot.lane.b32.xlu0 %v140, 119
    %v443 = vpop.permute.xlu0 %442
    %444 = vrot.lane.b32.xlu0 %v179, 119
    %v445 = vpop.permute.xlu0 %444
    %446 = vrot.lane.b32.xlu0 %v181, 119
    %v447 = vpop.permute.xlu0 %446
    %448 = vrot.lane.b32.xlu0 %v220, 119
    %v449 = vpop.permute.xlu0 %448
    %vm450 = vcmp.lt.s32.totalorder %v241, 119
    %v451 = vsel %vm450, %v447, %v449
    %v452 = vsel %vm450, %v445, %v447
    %v453 = vsel %vm450, %v443, %v445
    %v454 = vsel %vm450, %v441, %v443
    %v455 = vsel %vm450, %v449, %v441
    %v456 = vmul.f32 %v454, 0.007598758
    %v457 = vmul.f32 %v453, 0.007598758
    %v458 = vmul.f32 %v452, 0.007598758
    %v459 = vmul.f32 %v451, 0.007598758
    %v460 = vmul.f32 %v455, 0.007598758
    %v461 = vadd.f32 %v435, %v456
    %v462 = vadd.f32 %v436, %v457
    %v463 = vadd.f32 %v437, %v458
    %v464 = vadd.f32 %v438, %v459
    %v465 = vadd.f32 %v439, %v460
    %466 = vrot.lane.b32.xlu0 %v138, 118
    %v467 = vpop.permute.xlu0 %466
    %468 = vrot.lane.b32.xlu0 %v140, 118
    %v469 = vpop.permute.xlu0 %468
    %470 = vrot.lane.b32.xlu0 %v179, 118
    %v471 = vpop.permute.xlu0 %470
    %472 = vrot.lane.b32.xlu0 %v181, 118
    %v473 = vpop.permute.xlu0 %472
    %474 = vrot.lane.b32.xlu0 %v220, 118
    %v475 = vpop.permute.xlu0 %474
    %vm476 = vcmp.lt.s32.totalorder %v241, 118
    %v477 = vsel %vm476, %v473, %v475
    %v478 = vsel %vm476, %v471, %v473
    %v479 = vsel %vm476, %v469, %v471
    %v480 = vsel %vm476, %v467, %v469
    %v481 = vsel %vm476, %v475, %v467
    %v482 = vmul.f32 %v480, 0.0010283801
    %v483 = vmul.f32 %v479, 0.0010283801
    %v484 = vmul.f32 %v478, 0.0010283801
    %v485 = vmul.f32 %v477, 0.0010283801
    %v486 = vmul.f32 %v481, 0.0010283801
    %v487 = vadd.f32 %v461, %v482
    %v488 = vadd.f32 %v462, %v483
    %v489 = vadd.f32 %v463, %v484
    %v490 = vadd.f32 %v464, %v485
    %v491 = vadd.f32 %v465, %v486
    %v492 = vmul.f32 %v487, %v487
    %v493 = vmul.f32 %v488, %v488
    %v494 = vmul.f32 %v487, %v488
    %v495 = vsub.f32 %v489, %v492
    %v496 = vsub.f32 %v490, %v493
    %v497 = vsub.f32 %v491, %v494
    %v498 = vmul.f32 %v494, 2.0
    %v499 = vadd.f32 %v498, 0.0001
    %v500 = vmul.f32 %v497, 2.0
    %v501 = vadd.f32 %v500, 0.0009
    %v502 = vmul.f32 %v499, %v501
    %v503 = vadd.f32 %v492, %v493
    %v504 = vadd.f32 %v503, 0.0001
    %v505 = vadd.f32 %v495, %v496
    %v506 = vadd.f32 %v505, 0.0009
    %v507 = vmul.f32 %v504, %v506
    %v508 = vmax.f32 %v507, 1e-20
    %v509 = vrcp.pop %v508
    %v510 = vmul.f32 %v502, %v509
    %vm511 = vcmask 1045504
    %v512 = vsel %vm511, %v510, 0.0
    %v513 = vrot.slane %v512, 4
    %v514 = vadd.f32 %v512, %v513
    %v515 = vrot.slane %v514, 2
    %v516 = vadd.f32 %v514, %v515
    %v517 = vrot.slane %v516, 1
    %v518 = vadd.f32 %v516, %v517
    %v519 = vld [vmem:[%s3] sm:$0xff]
    %v520 = vmul.f32 %v518, %v519
    %521 = vadd.xlane.f32.xlu0 %v520
    %v522 = vpop.xlane.xlu0 %521
    %v524 = vlaneseq
    %v525 = vshrl.u32 %v524, 7
    %v526 = vsub.s32 %v241, %v525
    %v527 = vrot.slane %v522, %v526
    %vm529 = vcmask 57344
    %530 = vst.msk [vmem:[#allocation8] sm:$0x1] %vm529, %v527
    // Predicated region
    $region30: #{tpu_custom_call.1} parent=1 // pred_check
      _
    $region31: #{tpu_custom_call.1} parent=1 // pred_check_branch
      %532 = sbr.rel (0) target = $region33
    $region32: #{tpu_custom_call.1} parent=1 // pred_region
      %s534 = ssub.s32 16, 16
      %535 = vsyncadd [#allocation4], %s534
      %s537 = sshll.u32 [#allocation8], 4
      %s538 = int_to_ptr.vmem [resolvable:$true] %s537
      %540 = dma.vmem_to_hbm [thread:$0]  %s538, 16, %s4, [#allocation4]
    $region33: #{tpu_custom_call.1} parent=1 // pred_fallthru
      _
    // Predicated region
    $region34: #{tpu_custom_call.1} parent=1 // pred_check
      _
    $region35: #{tpu_custom_call.1} parent=1 // pred_check_branch
      %542 = sbr.rel (0) target = $region37
    $region36: #{tpu_custom_call.1} parent=1 // pred_region
      %543 = dma.done [#allocation4], 16
    $region37: #{tpu_custom_call.1} parent=1 // pred_fallthru
      _
    %544 = vsyncpa [#allocation3], 1
    %545 = vsyncpa [#allocation6], 1
    %546 = vsyncpa [#allocation4], 1

</llo_original>
